<compile_context>
chip_gen: v7x
topology: tpu7x:2x2x1
jax: 0.10.0
libtpu: 0.0.40
codegen_flags: <defaults>
</compile_context>

<pallas_src>
import functools

import jax
import jax.numpy as jnp
from jax.experimental import pallas as pl
from jax.experimental.pallas import tpu as pltpu


def _contrastive_loss_kernel(o1_ref, o2_ref, t_ref, out_ref, acc_ref, *,
                             margin, eps, batch, tile_rows, n_inner):
    i = pl.program_id(0)   # "parallel" axis (megacore split)
    j = pl.program_id(1)   # "arbitrary" reduction axis over batch tiles

    @pl.when(j == 0)
    def _():
        acc_ref[...] = jnp.zeros_like(acc_ref)

    o1 = o1_ref[...].astype(jnp.float32)
    o2 = o2_ref[...].astype(jnp.float32)
    t = t_ref[...].astype(jnp.float32)                       # (TB, 1)

    diff = o2 - o1
    dist = jnp.sum(diff * diff, axis=1, keepdims=True)       # (TB, 1)

    hinge = jnp.maximum(margin - jnp.sqrt(dist + eps), 0.0)
    per_row = 0.5 * (t * dist + (1.0 - t) * hinge * hinge)   # (TB, 1)

    # Mask rows past the true batch size (padded last tile).
    tile_idx = i * n_inner + j
    row_ids = tile_idx * tile_rows + jax.lax.broadcasted_iota(
        jnp.int32, per_row.shape, 0)
    per_row = jnp.where(row_ids < batch, per_row, 0.0)

    acc_ref[...] += jnp.sum(per_row).reshape(1, 1)

    @pl.when(j == pl.num_programs(1) - 1)
    def _():
        out_ref[...] = acc_ref[...]


def _pick_tile_rows(batch, dim, itemsize):
    # 2 inputs x 2 pipeline buffers of (TB, D) must fit comfortably in the
    # default scoped VMEM on every generation (v7x has the least headroom).
    budget_bytes = 8 * 1024 * 1024
    sublane = 8 if itemsize >= 4 else 16
    tb = budget_bytes // max(1, 4 * dim * itemsize)
    tb = max(sublane, min(tb, 2048))
    tb = (tb // sublane) * sublane
    if tb >= batch:
        return batch   # single full-batch block (full-extent dim is always legal)
    return tb


def contrastive_loss(output1, output2, target, *, margin=1.0, eps=1e-9,
                     block_rows=None):
    B, D = output1.shape
    assert output2.shape == (B, D)

    if target.dtype == jnp.bool_:
        target = target.astype(jnp.int32)
    t2d = target.reshape(B, 1)

    itemsize = jnp.dtype(output1.dtype).itemsize
    sublane = 8 if itemsize >= 4 else 16
    tb = block_rows if block_rows is not None else _pick_tile_rows(B, D, itemsize)
    tb = min(tb, B)
    if tb < B:
        tb = max(sublane, (tb // sublane) * sublane)

    n_tiles = pl.cdiv(B, tb)
    # 2-way batch split across TensorCores (v7x megacore); only when the tile
    # count divides evenly so every block index stays in range.
    n_outer = 2 if (n_tiles >= 2 and n_tiles % 2 == 0) else 1
    n_inner = n_tiles // n_outer

    kernel = functools.partial(
        _contrastive_loss_kernel,
        margin=float(margin), eps=float(eps), batch=B,
        tile_rows=tb, n_inner=n_inner)

    emb_spec = pl.BlockSpec((tb, D), lambda i, j: (i * n_inner + j, 0))
    tgt_spec = pl.BlockSpec((tb, 1), lambda i, j: (i * n_inner + j, 0))

    cost = pl.CostEstimate(
        flops=3 * B * D + 8 * B,
        transcendentals=B,
        bytes_accessed=2 * B * D * itemsize
        + B * jnp.dtype(t2d.dtype).itemsize + n_outer * 4)

    partial_sums = pl.pallas_call(
        kernel,
        out_shape=jax.ShapeDtypeStruct((n_outer, 1), jnp.float32),
        grid_spec=pltpu.PrefetchScalarGridSpec(
            num_scalar_prefetch=0,
            grid=(n_outer, n_inner),
            in_specs=[emb_spec, emb_spec, tgt_spec],
            out_specs=pl.BlockSpec((1, 1), lambda i, j: (i, 0)),
            scratch_shapes=[pltpu.VMEM((1, 1), jnp.float32)]),
        compiler_params=pltpu.CompilerParams(
            dimension_semantics=("parallel", "arbitrary")),
        cost_estimate=cost,
    )(output1, output2, t2d)

    return jnp.sum(partial_sums) / B


def _reference(output1, output2, target, margin=1.0, eps=1e-9):
    o1 = output1.astype(jnp.float32)
    o2 = output2.astype(jnp.float32)
    distances = jnp.sum((o2 - o1) ** 2, axis=1)
    tf = target.astype(jnp.float32)
    losses = 0.5 * (
        tf * distances
        + (1.0 - tf) * jnp.maximum(margin - jnp.sqrt(distances + eps), 0.0) ** 2
    )
    return jnp.mean(losses)


if __name__ == "__main__":
    key = jax.random.PRNGKey(0)
    k1, k2, k3 = jax.random.split(key, 3)

    # Small shapes matching the module: (B, D) embeddings + (B,) labels.
    B, D = 8, 32
    output1 = jax.random.normal(k1, (B, D), dtype=jnp.float32)
    output2 = jax.random.normal(k2, (B, D), dtype=jnp.float32)
    target = jax.random.bernoulli(k3, 0.5, (B,)).astype(jnp.int32)

    loss = jax.block_until_ready(contrastive_loss(output1, output2, target))
    ref = _reference(output1, output2, target)
    assert jnp.allclose(loss, ref, rtol=1e-5, atol=1e-5), (loss, ref)

    # Exercise the tiled path with a padded (non-divisible) last tile.
    B2, D2 = 300, 64
    o1b = jax.random.normal(k1, (B2, D2), dtype=jnp.float32)
    o2b = jax.random.normal(k2, (B2, D2), dtype=jnp.float32)
    tb2 = jax.random.bernoulli(k3, 0.5, (B2,)).astype(jnp.int32)
    loss2 = jax.block_until_ready(contrastive_loss(o1b, o2b, tb2, block_rows=64))
    ref2 = _reference(o1b, o2b, tb2)
    assert jnp.allclose(loss2, ref2, rtol=1e-5, atol=1e-5), (loss2, ref2)

    # Exercise the 2-way parallel (megacore) partial-sum path + bf16 inputs.
    B3, D3 = 256, 64
    o1c = jax.random.normal(k1, (B3, D3), dtype=jnp.bfloat16)
    o2c = jax.random.normal(k2, (B3, D3), dtype=jnp.bfloat16)
    tc3 = jax.random.bernoulli(k3, 0.5, (B3,)).astype(jnp.int32)
    loss3 = jax.block_until_ready(contrastive_loss(o1c, o2c, tc3, block_rows=64))
    ref3 = _reference(o1c, o2c, tc3)
    assert jnp.allclose(loss3, ref3, rtol=1e-5, atol=1e-5), (loss3, ref3)

    print("KERNEL_OK")
</pallas_src>

<mosaic_0001>
module attributes {stable_mosaic.version = 11 : i64} {
  func.func @_contrastive_loss_kernel(%arg0: i32, %arg1: i32, %arg2: memref<8x32xf32, #tpu.memory_space<vmem>>, %arg3: memref<8x32xf32, #tpu.memory_space<vmem>>, %arg4: memref<8x1xi32, #tpu.memory_space<vmem>>, %arg5: memref<1x1xf32, #tpu.memory_space<vmem>>, %arg6: memref<1x1xf32, #tpu.memory_space<vmem>>) attributes {dimension_semantics = [#tpu.dimension_semantics<parallel>, #tpu.dimension_semantics<arbitrary>], iteration_bounds = array<i64: 1, 1>, scalar_prefetch = 0 : i64, scratch_operands = 1 : i64, tpu.core_type = #tpu.core_type<tc>, window_params = [{transform_indices = @transform_0, window_bounds = array<i64: 8, 32>}, {transform_indices = @transform_1, window_bounds = array<i64: 8, 32>}, {transform_indices = @transform_2, window_bounds = array<i64: 8, 1>}, {transform_indices = @transform_3, window_bounds = array<i64: 1, 1>}]} {
    %c0_i32 = arith.constant 0 : i32
    %0 = arith.cmpi eq, %arg1, %c0_i32 : i32
    %1 = arith.extui %0 : i1 to i32
    %c0_i32_0 = arith.constant 0 : i32
    %2 = arith.cmpi ne, %1, %c0_i32_0 : i32
    scf.if %2 {
      %cst_20 = arith.constant 0.000000e+00 : f32
      %47 = vector.broadcast %cst_20 : f32 to vector<1x1xf32>
      %c0_21 = arith.constant 0 : index
      %c0_22 = arith.constant 0 : index
      %48 = vector.load %arg6[%c0_21, %c0_22] : memref<1x1xf32, #tpu.memory_space<vmem>>, vector<1x1xf32>
      tpu.vector_store %arg6[%c0_21, %c0_22], %47 {strides = array<i32>} : memref<1x1xf32, #tpu.memory_space<vmem>>, vector<1x1xf32>,
    } else {
    }
    %c0 = arith.constant 0 : index
    %c0_1 = arith.constant 0 : index
    %3 = vector.load %arg2[%c0, %c0_1] : memref<8x32xf32, #tpu.memory_space<vmem>>, vector<8x32xf32>
    %c0_2 = arith.constant 0 : index
    %c0_3 = arith.constant 0 : index
    %4 = vector.load %arg3[%c0_2, %c0_3] : memref<8x32xf32, #tpu.memory_space<vmem>>, vector<8x32xf32>
    %c0_4 = arith.constant 0 : index
    %c0_5 = arith.constant 0 : index
    %5 = vector.load %arg4[%c0_4, %c0_5] : memref<8x1xi32, #tpu.memory_space<vmem>>, vector<8x1xi32>
    %6 = arith.sitofp %5 : vector<8x1xi32> to vector<8x1xf32>
    %7 = arith.subf %4, %3 : vector<8x32xf32>
    %8 = arith.mulf %7, %7 : vector<8x32xf32>
    %cst = arith.constant dense<0.000000e+00> : vector<8xf32>
    %9 = vector.multi_reduction <add>, %8, %cst [1] : vector<8x32xf32> to vector<8xf32>
    %10 = vector.shape_cast %9 : vector<8xf32> to vector<8x1xf32>
    %cst_6 = arith.constant 9.99999971E-10 : f32
    %11 = vector.broadcast %cst_6 : f32 to vector<8x1xf32>
    %12 = arith.addf %10, %11 : vector<8x1xf32>
    %13 = math.sqrt %12 : vector<8x1xf32>
    %cst_7 = arith.constant 1.000000e+00 : f32
    %14 = vector.broadcast %cst_7 : f32 to vector<8x1xf32>
    %15 = arith.subf %14, %13 : vector<8x1xf32>
    %cst_8 = arith.constant 0.000000e+00 : f32
    %16 = vector.broadcast %cst_8 : f32 to vector<8x1xf32>
    %17 = arith.maximumf %15, %16 : vector<8x1xf32>
    %18 = arith.mulf %6, %10 : vector<8x1xf32>
    %cst_9 = arith.constant 1.000000e+00 : f32
    %19 = vector.broadcast %cst_9 : f32 to vector<8x1xf32>
    %20 = arith.subf %19, %6 : vector<8x1xf32>
    %21 = arith.mulf %20, %17 : vector<8x1xf32>
    %22 = arith.mulf %21, %17 : vector<8x1xf32>
    %23 = arith.addf %18, %22 : vector<8x1xf32>
    %cst_10 = arith.constant 5.000000e-01 : f32
    %24 = vector.broadcast %cst_10 : f32 to vector<8x1xf32>
    %25 = arith.mulf %24, %23 : vector<8x1xf32>
    %c1_i32 = arith.constant 1 : i32
    %26 = arith.muli %arg0, %c1_i32 : i32
    %27 = arith.addi %26, %arg1 : i32
    %c8_i32 = arith.constant 8 : i32
    %28 = arith.muli %27, %c8_i32 : i32
    %29 = tpu.iota {dimensions = array<i32: 0>} : vector<8x1xi32>
    %30 = vector.broadcast %28 : i32 to vector<8x1xi32>
    %31 = arith.addi %30, %29 : vector<8x1xi32>
    %c8_i32_11 = arith.constant 8 : i32
    %32 = vector.broadcast %c8_i32_11 : i32 to vector<8x1xi32>
    %33 = arith.cmpi slt, %31, %32 : vector<8x1xi32>
    %cst_12 = arith.constant 0.000000e+00 : f32
    %34 = vector.broadcast %cst_12 : f32 to vector<8x1xf32>
    %35 = arith.select %33, %25, %34 : vector<8x1xi1>, vector<8x1xf32>
    %c0_13 = arith.constant 0 : index
    %c0_14 = arith.constant 0 : index
    %36 = vector.load %arg6[%c0_13, %c0_14] : memref<1x1xf32, #tpu.memory_space<vmem>>, vector<1x1xf32>
    %37 = vector.shape_cast %35 : vector<8x1xf32> to vector<1x8x1xf32>
    %cst_15 = arith.constant dense<0.000000e+00> : vector<1xf32>
    %38 = vector.multi_reduction <add>, %37, %cst_15 [1, 2] : vector<1x8x1xf32> to vector<1xf32>
    %39 = vector.shape_cast %38 : vector<1xf32> to vector<1x1x1xf32>
    %40 = vector.extract %39[0, 0, 0] : f32 from vector<1x1x1xf32>
    %41 = vector.broadcast %40 : f32 to vector<1x1xf32>
    %42 = arith.addf %36, %41 : vector<1x1xf32>
    %c0_16 = arith.constant 0 : index
    %c0_17 = arith.constant 0 : index
    %43 = vector.load %arg6[%c0_16, %c0_17] : memref<1x1xf32, #tpu.memory_space<vmem>>, vector<1x1xf32>
    tpu.vector_store %arg6[%c0_16, %c0_17], %42 {strides = array<i32>} : memref<1x1xf32, #tpu.memory_space<vmem>>, vector<1x1xf32>,
    %c0_i32_18 = arith.constant 0 : i32
    %44 = arith.cmpi eq, %arg1, %c0_i32_18 : i32
    %45 = arith.extui %44 : i1 to i32
    %c0_i32_19 = arith.constant 0 : i32
    %46 = arith.cmpi ne, %45, %c0_i32_19 : i32
    scf.if %46 {
      %c0_20 = arith.constant 0 : index
      %c0_21 = arith.constant 0 : index
      %47 = vector.load %arg6[%c0_20, %c0_21] : memref<1x1xf32, #tpu.memory_space<vmem>>, vector<1x1xf32>
      %c0_22 = arith.constant 0 : index
      %c0_23 = arith.constant 0 : index
      %48 = vector.load %arg5[%c0_22, %c0_23] : memref<1x1xf32, #tpu.memory_space<vmem>>, vector<1x1xf32>
      tpu.vector_store %arg5[%c0_22, %c0_23], %47 {strides = array<i32>} : memref<1x1xf32, #tpu.memory_space<vmem>>, vector<1x1xf32>,
    } else {
    }
    return
  }
  func.func @transform_0(%arg0: i32, %arg1: i32) -> (i32, i32) {
    %c1_i32 = arith.constant 1 : i32
    %0 = arith.muli %arg0, %c1_i32 : i32
    %1 = arith.addi %0, %arg1 : i32
    %c0_i32 = arith.constant 0 : i32
    %c0_i32_0 = arith.constant 0 : i32
    return %1, %c0_i32 : i32, i32
  }
  func.func @transform_1(%arg0: i32, %arg1: i32) -> (i32, i32) {
    %c1_i32 = arith.constant 1 : i32
    %0 = arith.muli %arg0, %c1_i32 : i32
    %1 = arith.addi %0, %arg1 : i32
    %c0_i32 = arith.constant 0 : i32
    %c0_i32_0 = arith.constant 0 : i32
    return %1, %c0_i32 : i32, i32
  }
  func.func @transform_2(%arg0: i32, %arg1: i32) -> (i32, i32) {
    %c1_i32 = arith.constant 1 : i32
    %0 = arith.muli %arg0, %c1_i32 : i32
    %1 = arith.addi %0, %arg1 : i32
    %c0_i32 = arith.constant 0 : i32
    %c0_i32_0 = arith.constant 0 : i32
    return %1, %c0_i32 : i32, i32
  }
  func.func @transform_3(%arg0: i32, %arg1: i32) -> (i32, i32) {
    %c0_i32 = arith.constant 0 : i32
    %c0_i32_0 = arith.constant 0 : i32
    return %arg0, %c0_i32 : i32, i32
  }
}

</mosaic_0001>

<llo_original>
// kernel: tpu_custom_call.1
$region0: #{tpu_custom_call.1}
  #allocation0 [shape = 'u32[]', space=smem, size = 0x4, offset = 0x4, fixed_abs, tag = 'smem constant byte address 0x4 - core index']
  #allocation1 [shape = 'u32[144,128]{1,0:T(1,128)}', space=vmem, size = 0x12000, scoped, tag = 'internal scratch']
  #allocation2 [shape = 'f32[1,1]{1,0:T(1,128)}', space=vmem, size = 0x200, scoped, tag = 'scratch operand']
  %s0 = inlined_call_operand.vmem [shape: f32[8,32], index: 0, kind: input, shape index: {}]
  %s1 = inlined_call_operand.hbm [shape: f32[8,32], index: 1, kind: input, shape index: {}]
  %s2 = inlined_call_operand.vmem [shape: s32[8,1], index: 2, kind: input, shape index: {}]
  %s3 = inlined_call_operand.hbm [shape: f32[1,1], index: 3, kind: output, shape index: {}]
  %s4 = sld [smem:[#allocation0]]
  $region34: #{tpu_custom_call.1} parent=0
    _
  %s6 = ssub.s32 1, %s4
  %s7 = scalar_select 0, %s6, %s4
  $region1: #{tpu_custom_call.1} parent=0
    #allocation3 [shape = 'u8[4096]{0}', space=vmem, size = 0x1000, scoped, tag = 'input window, operand 1, single buffered']
    #allocation4 [shape = 's32[1]{0}', space=sflag, size = 0x4, scoped, tag = 'scoped memory for tpu_custom_call.1']
    #allocation5 [shape = 's32[1]{0}', space=sflag, size = 0x4, scoped, tag = 'scoped memory for tpu_custom_call.1']
    #allocation6 [shape = 'u8[512]{0}', space=vmem, size = 0x400, scoped, tag = 'output window, operand 0, single buffered']
    %8 = vsyncpa [#allocation4], 0
    %9 = vsyncpa [#allocation5], 0
    // Predicated region
    $region2: #{tpu_custom_call.1} parent=1 // pred_check
      _
    $region3: #{tpu_custom_call.1} parent=1 // pred_check_branch
      %11 = sbr.rel (0) target = $region5
    $region4: #{tpu_custom_call.1} parent=1 // pred_region
      %s12 = sadd.s32 0, 0
      %p13 = scmp.lt.s32.totalorder %s12, 0
      %s14 = scalar_select %p13, %s12, 0
      %s15 = smul.addr %s14, 8
      %s16 = scalar_lea.vmem %s0, %s15
      %s17 = sadd.s32 0, 0
    $region5: #{tpu_custom_call.1} parent=1 // pred_fallthru
      _
    // Predicated region
    $region6: #{tpu_custom_call.1} parent=1 // pred_check
      _
    $region7: #{tpu_custom_call.1} parent=1 // pred_check_branch
      %19 = sbr.rel (0) target = $region9
    $region8: #{tpu_custom_call.1} parent=1 // pred_region
      %s20 = sadd.s32 0, 0
      %s22 = ssub.s32 128, 128
      %23 = vsyncadd [#allocation4], %s22
      %s24 = smul.addr %s20, 128
      %s25 = scalar_lea.hbm %s1, %s24
      %s27 = sshll.u32 [#allocation3], 4
      %s28 = int_to_ptr.vmem [resolvable:$true] %s27
      %30 = dma.hbm_to_vmem [thread:$0]  %s25, 128, %s28, [#allocation4]
    $region9: #{tpu_custom_call.1} parent=1 // pred_fallthru
      _
    // Predicated region
    $region10: #{tpu_custom_call.1} parent=1 // pred_check
      _
    $region11: #{tpu_custom_call.1} parent=1 // pred_check_branch
      %32 = sbr.rel (0) target = $region13
    $region12: #{tpu_custom_call.1} parent=1 // pred_region
      %s33 = sadd.s32 0, 0
      %p34 = scmp.lt.s32.totalorder %s33, 0
      %s35 = scalar_select %p34, %s33, 0
      %s36 = smul.addr %s35, 8
      %s37 = scalar_lea.vmem %s2, %s36
      %s38 = sadd.s32 0, 0
    $region13: #{tpu_custom_call.1} parent=1 // pred_fallthru
      _
    // Predicated region
    $region14: #{tpu_custom_call.1} parent=1 // pred_check
      _
    $region15: #{tpu_custom_call.1} parent=1 // pred_check_branch
      %40 = sbr.rel (0) target = $region17
    $region16: #{tpu_custom_call.1} parent=1 // pred_region
      %41 = dma.done [#allocation4], 128
    $region17: #{tpu_custom_call.1} parent=1 // pred_fallthru
      _
    %s42 = sadd.s32 0, 0
    %p43 = scmp.lt.s32.totalorder %s42, 0
    %s44 = scalar_select %p43, %s42, 0
    %s45 = smul.addr %s44, 8
    %s46 = scalar_lea.vmem %s0, %s45
    %s47 = sadd.s32 0, 0
    %p48 = scmp.lt.s32.totalorder %s47, 0
    %s49 = scalar_select %p48, %s47, 0
    %s50 = smul.addr %s49, 8
    %s51 = scalar_lea.vmem %s2, %s50
    %s52 = sadd.s32 0, 0
    %p53 = scmp.lt.s32.totalorder %s52, 0
    %s54 = scalar_select %p53, %s52, 0
    %s55 = smul.addr %s54, 8
    %s56 = scalar_lea.vmem %s0, %s55
    %s57 = sadd.s32 0, 0
    %s58 = sadd.s32 0, 0
    %s59 = sadd.s32 0, 0
    %p60 = scmp.lt.s32.totalorder %s59, 0
    %s61 = scalar_select %p60, %s59, 0
    %s62 = smul.addr %s61, 8
    %s63 = scalar_lea.vmem %s2, %s62
    %s64 = sadd.s32 0, 0
    %p65 = scmp.eq.s32.totalorder 0, 0
    // Predicated region
    $region18: #{tpu_custom_call.1} parent=1 // pred_check
      %p66 = pneg %p65
    $region19: #{tpu_custom_call.1} parent=1 // pred_check_branch
      %68 = sbr.rel (%p66) target = $region21
    $region20: #{tpu_custom_call.1} parent=1 // pred_region
      %vm69 = vcmask 0
      %70 = vst.msk [vmem:[#allocation2] sm:$0x1] %vm69, 0.0
    $region21: #{tpu_custom_call.1} parent=1 // pred_fallthru
      _
    %v71 = vld [vmem:[%s56] sm:$0xff]
    %v72 = vld [vmem:[#allocation3] sm:$0xff]
    %v73 = vld [vmem:[%s63] sm:$0xff]
    %v74 = vcvt.s32.f32 %v73
    %v75 = vsub.f32 %v72, %v71
    %v76 = vmul.f32 %v75, %v75
    %vm77 = vcmask 261120
    %v78 = vsel %vm77, %v76, 0.0
    %79 = vadd.xlane.f32.xlu0 %v78
    %v80 = vpop.xlane.xlu0 %79
    %v81 = vadd.f32 %v80, 1e-09
    %v82 = vrsqrt.pop %v81
    %v83 = vmul.f32 %v81, %v82
    %vm84 = vcmp.eq.f32.partialorder %v81, inf
    %v85 = vsel %vm84, %v81, %v83
    %vm86 = vcmp.eq.f32.partialorder %v81, 0.0
    %v87 = vand.u32 %v81, 2147483648
    %v88 = vsel %vm86, %v87, %v85
    %v89 = vsub.f32 1.0, %v88
    %v90 = vmax.f32 %v89, 0.0
    %v91 = vmul.f32 %v74, %v80
    %v92 = vsub.f32 1.0, %v74
    %v93 = vmul.f32 %v92, %v90
    %v94 = vmul.f32 %v93, %v90
    %v95 = vadd.f32 %v91, %v94
    %v96 = vmul.f32 %v95, 0.5
    %s97 = sadd.s32 0, 0
    %s98 = smul.u32 %s97, 8
    %v99 = vlaneseq
    %v100 = vshrl.u32 %v99, 7
    %v101 = vstv %s98
    %v102 = vadd.s32 %v101, %v100
    %vm103 = vcmp.lt.s32.totalorder %v102, 8
    %v104 = vsel %vm103, %v96, 0.0
    %v105 = vld [vmem:[#allocation2] sm:$0x1]
    %vm106 = vcmask 7168
    %v107 = vsel %vm106, %v104, 0.0
    %108 = vadd.xlane.f32.xlu0 %v107
    %v109 = vpop.xlane.xlu0 %108
    %v110 = vrot.slane %v109, 4
    %v111 = vadd.f32 %v109, %v110
    %v112 = vrot.slane %v111, 2
    %v113 = vadd.f32 %v111, %v112
    %v114 = vrot.slane %v113, 1
    %v115 = vadd.f32 %v113, %v114
    %s116 = vtos %v115
    %v117 = vstv %s116
    %v118 = vadd.f32 %v105, %v117
    %vm119 = vcmask 0
    %120 = vst.msk [vmem:[#allocation2] sm:$0x1] %vm119, %v118
    // Predicated region
    $region22: #{tpu_custom_call.1} parent=1 // pred_check
      %p121 = pneg %p65
    $region23: #{tpu_custom_call.1} parent=1 // pred_check_branch
      %123 = sbr.rel (%p121) target = $region25
    $region24: #{tpu_custom_call.1} parent=1 // pred_region
      %v124 = vld [vmem:[#allocation2] sm:$0x1]
      %125 = vst.msk [vmem:[#allocation6] sm:$0x1] %vm119, %v124
    $region25: #{tpu_custom_call.1} parent=1 // pred_fallthru
      _
    // Predicated region
    $region26: #{tpu_custom_call.1} parent=1 // pred_check
      _
    $region27: #{tpu_custom_call.1} parent=1 // pred_check_branch
      %127 = sbr.rel (0) target = $region29
    $region28: #{tpu_custom_call.1} parent=1 // pred_region
      %s129 = ssub.s32 16, 16
      %130 = vsyncadd [#allocation5], %s129
      %s132 = sshll.u32 [#allocation6], 4
      %s133 = int_to_ptr.vmem [resolvable:$true] %s132
      %135 = dma.vmem_to_hbm [thread:$0]  %s133, 16, %s3, [#allocation5]
    $region29: #{tpu_custom_call.1} parent=1 // pred_fallthru
      _
    // Predicated region
    $region30: #{tpu_custom_call.1} parent=1 // pred_check
      _
    $region31: #{tpu_custom_call.1} parent=1 // pred_check_branch
      %137 = sbr.rel (0) target = $region33
    $region32: #{tpu_custom_call.1} parent=1 // pred_region
      %138 = dma.done [#allocation5], 16
    $region33: #{tpu_custom_call.1} parent=1 // pred_fallthru
      _
    %139 = vsyncpa [#allocation4], 1
    %140 = vsyncpa [#allocation5], 1

</llo_original>
